<compile_context>
chip_gen: v6e
topology: v6e:2x2x1
jax: 0.10.0
libtpu: 0.0.40
codegen_flags: <defaults>
</compile_context>

<pallas_src>
import functools
import math

import jax
import jax.numpy as jnp
from jax.experimental import pallas as pl
from jax.experimental.pallas import tpu as pltpu

_LANE = 128
_SUB = 8
_SMALL_N_MAX = 256


def _ceil_to(x, m):
    return ((x + m - 1) // m) * m


# ----------------------------------------------------------------------------
# Pallas kernels
# ----------------------------------------------------------------------------

def _gc_small_kernel(x_ref, adj_ref, w_ref, b_ref, o_ref, *, support_first,
                     apply_relu):
    """Single-block-per-batch graph convolution (small N)."""
    adj = adj_ref[...]
    x = x_ref[...]
    w = w_ref[...]
    if support_first:                       # Fout_p < Fin_p: adj @ (x @ W)
        support = jnp.dot(x, w, preferred_element_type=jnp.float32)
        out = jnp.dot(adj, support, preferred_element_type=jnp.float32)
    else:                                   # (adj @ x) @ W
        ax = jnp.dot(adj, x, preferred_element_type=jnp.float32)
        out = jnp.dot(ax, w, preferred_element_type=jnp.float32)
    out = out + b_ref[...]
    if apply_relu:
        out = jnp.maximum(out, 0.0)
    o_ref[...] = out.astype(o_ref.dtype)


def _gc_tiled_kernel_wlast(x_ref, adj_ref, w_ref, b_ref, o_ref, acc_ref, *,
                           tk, apply_relu):
    """acc += adj_tile @ x_k  (x resident per batch);  finalize: acc @ W + b."""
    k = pl.program_id(2)

    @pl.when(k == 0)
    def _init():
        acc_ref[...] = jnp.zeros_like(acc_ref)

    start = pl.multiple_of(k * tk, 256)
    xk = x_ref[pl.ds(start, tk), :]
    acc_ref[...] += jnp.dot(adj_ref[...], xk,
                            preferred_element_type=jnp.float32)

    @pl.when(k == pl.num_programs(2) - 1)
    def _finalize():
        out = jnp.dot(acc_ref[...], w_ref[...],
                      preferred_element_type=jnp.float32) + b_ref[...]
        if apply_relu:
            out = jnp.maximum(out, 0.0)
        o_ref[...] = out.astype(o_ref.dtype)


def _gc_tiled_kernel_noweight(s_ref, adj_ref, b_ref, o_ref, acc_ref, *,
                              tk, apply_relu):
    """support = x @ W precomputed outside; acc += adj_tile @ support_k."""
    k = pl.program_id(2)

    @pl.when(k == 0)
    def _init():
        acc_ref[...] = jnp.zeros_like(acc_ref)

    start = pl.multiple_of(k * tk, 256)
    sk = s_ref[pl.ds(start, tk), :]
    acc_ref[...] += jnp.dot(adj_ref[...], sk,
                            preferred_element_type=jnp.float32)

    @pl.when(k == pl.num_programs(2) - 1)
    def _finalize():
        out = acc_ref[...] + b_ref[...]
        if apply_relu:
            out = jnp.maximum(out, 0.0)
        o_ref[...] = out.astype(o_ref.dtype)


# ----------------------------------------------------------------------------
# Wrappers
# ----------------------------------------------------------------------------

def _graph_conv_small(x, adj, weight, bias2d, out_dtype, apply_relu):
    B, N, Fin = x.shape
    Fout = weight.shape[1]
    # Minimal padding: sublane dims -> multiple of 8, lane dims -> multiple
    # of 128 (contraction dim of adj is a lane dim, so it pads to 128 and the
    # matching x rows pad to the same size).
    Nr = _ceil_to(N, _SUB)          # output rows / adj rows
    Nk = _ceil_to(N, _LANE)         # adj cols == x rows (contraction)
    Fin_p = _ceil_to(Fin, _LANE)
    Fout_p = _ceil_to(Fout, _LANE)

    xp = jnp.pad(x, ((0, 0), (0, Nk - N), (0, Fin_p - Fin)))
    adjp = jnp.pad(adj, ((0, 0), (0, Nr - N), (0, Nk - N)))
    wp = jnp.pad(weight, ((0, Fin_p - Fin), (0, Fout_p - Fout)))
    bp = jnp.pad(bias2d, ((0, 0), (0, Fout_p - Fout)))

    support_first = Fout_p < Fin_p
    kernel = functools.partial(_gc_small_kernel, support_first=support_first,
                               apply_relu=apply_relu)

    out_p = pl.pallas_call(
        kernel,
        out_shape=jax.ShapeDtypeStruct((B, Nr, Fout_p), out_dtype),
        grid_spec=pltpu.PrefetchScalarGridSpec(
            num_scalar_prefetch=0,
            grid=(B,),
            in_specs=[
                pl.BlockSpec((pl.Squeezed(), Nk, Fin_p), lambda b: (b, 0, 0)),
                pl.BlockSpec((pl.Squeezed(), Nr, Nk), lambda b: (b, 0, 0)),
                pl.BlockSpec((Fin_p, Fout_p), lambda b: (0, 0)),
                pl.BlockSpec((1, Fout_p), lambda b: (0, 0)),
            ],
            out_specs=pl.BlockSpec((pl.Squeezed(), Nr, Fout_p),
                                   lambda b: (b, 0, 0)),
        ),
        compiler_params=pltpu.CompilerParams(
            dimension_semantics=("parallel",),
        ),
    )(xp, adjp, wp, bp)
    return out_p[:, :N, :Fout]


def _graph_conv_tiled(x, adj, weight, bias2d, out_dtype, apply_relu):
    B, N, Fin = x.shape
    Fout = weight.shape[1]
    Fin_p = _ceil_to(Fin, _LANE)
    Fout_p = _ceil_to(Fout, _LANE)

    # Pad N to a multiple of 256 so 256-wide tiles always fit (full MXU on
    # v6e/v7x, small grid); do the whole k extent in one step when it is
    # small enough, otherwise 512/256-wide k tiles.
    TM = 256
    N_pad = _ceil_to(N, TM)
    if N_pad <= 1024:
        TK = N_pad
    elif N_pad % 512 == 0:
        TK = 512
    else:
        TK = 256
    n_k = N_pad // TK

    support_first = Fout_p < Fin_p
    if support_first:
        # Hoist the tiny x @ W out of the kernel: no per-row-tile recompute,
        # narrower resident feature matrix + accumulator (Fout_p).
        hi = jax.lax.Precision.HIGHEST
        feat = jnp.einsum("bnf,fo->bno", x, weight, precision=hi).astype(x.dtype)
        Ff = Fout_p
        featp = jnp.pad(feat, ((0, 0), (0, N_pad - N), (0, Fout_p - Fout)))
    else:
        Ff = Fin_p
        featp = jnp.pad(x, ((0, 0), (0, N_pad - N), (0, Fin_p - Fin)))

    # TODO(synk): when N is not 128-aligned this still materializes a padded
    # copy of adj in HBM; an in-kernel mask of the last k tile would avoid it.
    adjp = jnp.pad(adj, ((0, 0), (0, N_pad - N), (0, N_pad - N)))
    bp = jnp.pad(bias2d, ((0, 0), (0, Fout_p - Fout)))

    grid = (B, N_pad // TM, n_k)

    # feature matrix (x or support) is resident per batch: index map constant
    # over (i, k); the k window is sliced in-kernel with pl.ds.
    feat_spec = pl.BlockSpec((pl.Squeezed(), N_pad, Ff), lambda b, i, k: (b, 0, 0))
    adj_spec = pl.BlockSpec((pl.Squeezed(), TM, TK), lambda b, i, k: (b, i, k))
    bias_spec = pl.BlockSpec((1, Fout_p), lambda b, i, k: (0, 0))
    out_spec = pl.BlockSpec((pl.Squeezed(), TM, Fout_p), lambda b, i, k: (b, i, 0))

    if support_first:
        kernel = functools.partial(_gc_tiled_kernel_noweight, tk=TK,
                                   apply_relu=apply_relu)
        in_specs = [feat_spec, adj_spec, bias_spec]
        operands = (featp, adjp, bp)
        w_bytes = 0
    else:
        wp = jnp.pad(weight, ((0, Fin_p - Fin), (0, Fout_p - Fout)))
        # TODO(synk): W is held full-size (fine for GCN-sized weights); a huge
        # Fin x Fout weight would need an extra Fout grid axis on v7x.
        w_spec = pl.BlockSpec((Fin_p, Fout_p), lambda b, i, k: (0, 0))
        kernel = functools.partial(_gc_tiled_kernel_wlast, tk=TK,
                                   apply_relu=apply_relu)
        in_specs = [feat_spec, adj_spec, w_spec, bias_spec]
        operands = (featp, adjp, wp, bp)
        w_bytes = Fin_p * Fout_p * wp.dtype.itemsize

    # Tight VMEM ask: double-buffered blocks + f32 accumulator + slack, so it
    # leaves headroom on v7x's 64 MiB per-core VMEM.
    out_itemsize = jnp.dtype(out_dtype).itemsize
    est = 2 * (N_pad * Ff * featp.dtype.itemsize
               + TM * TK * adjp.dtype.itemsize
               + w_bytes
               + Fout_p * 4
               + TM * Fout_p * out_itemsize)
    est += TM * Ff * 4
    vmem_limit = int(min(64 * 1024 * 1024, max(est + (4 << 20), 8 * 1024 * 1024)))

    out_p = pl.pallas_call(
        kernel,
        out_shape=jax.ShapeDtypeStruct((B, N_pad, Fout_p), out_dtype),
        grid_spec=pltpu.PrefetchScalarGridSpec(
            num_scalar_prefetch=0,
            grid=grid,
            in_specs=in_specs,
            out_specs=out_spec,
            scratch_shapes=[pltpu.VMEM((TM, Ff), jnp.float32)],
        ),
        compiler_params=pltpu.CompilerParams(
            dimension_semantics=("parallel", "parallel", "arbitrary"),
            vmem_limit_bytes=vmem_limit,
        ),
    )(*operands)
    return out_p[:, :N, :Fout]


def graph_convolution(x, adj, weight, bias=None, *, apply_relu=False,
                      compute_dtype=None):
    """x: [B, N, Fin], adj: [B, N, N], weight: [Fin, Fout], bias: [Fout]|None."""
    B, N, Fin = x.shape
    Fin_w, Fout = weight.shape
    assert Fin_w == Fin and adj.shape == (B, N, N)
    if bias is None:
        bias = jnp.zeros((Fout,), x.dtype)
    out_dtype = x.dtype
    if compute_dtype is not None:
        # Optional bf16 MXU operands (f32 accumulation); default keeps f32
        # for exact parity with the PyTorch reference.
        x = x.astype(compute_dtype)
        adj = adj.astype(compute_dtype)
        weight = weight.astype(compute_dtype)
    bias2d = bias.reshape(1, Fout).astype(jnp.float32)

    if N <= _SMALL_N_MAX:
        return _graph_conv_small(x, adj, weight, bias2d, out_dtype, apply_relu)
    return _graph_conv_tiled(x, adj, weight, bias2d, out_dtype, apply_relu)


def graph_convolution_reference(x, adj, weight, bias, *, apply_relu=False,
                                compute_dtype=None):
    del compute_dtype
    hi = jax.lax.Precision.HIGHEST
    support = jnp.einsum("bnf,fo->bno", x, weight, precision=hi)
    out = jnp.einsum("bnm,bmo->bno", adj, support, precision=hi) + bias
    return jnp.maximum(out, 0.0) if apply_relu else out


# ----------------------------------------------------------------------------
# Full GCN forward (eval mode), built on the Pallas graph-convolution kernel.
# ----------------------------------------------------------------------------

def _scatter_max(x, groups, num_segments):
    """torch_scatter-style scatter(x, groups, dim=1, reduce='max')."""
    # TODO(synk): empty-segment fill convention may differ across
    # torch_scatter versions; here empty segments become 0.
    onehot = groups[:, :, None] == jnp.arange(num_segments)[None, None, :]
    neg = jnp.asarray(-jnp.inf, x.dtype)
    vals = jnp.where(onehot[:, :, :, None], x[:, :, None, :], neg)
    out = jnp.max(vals, axis=1)
    return jnp.where(jnp.isfinite(out), out, jnp.zeros((), x.dtype))


def _uniform(key, shape, bound):
    return jax.random.uniform(key, shape, jnp.float32, minval=-bound, maxval=bound)


def init_gcn_params(key, fea_dim, class_num, global_cluster_num):
    gc_out_dim = 16
    hidden_dim = 512
    dims = [(fea_dim, fea_dim * 2), (fea_dim * 2, fea_dim * 4), (fea_dim * 4, gc_out_dim)]
    keys = jax.random.split(key, 10)
    p = {}
    for idx, (fi, fo) in enumerate(dims, start=1):
        stdv = 1.0 / math.sqrt(fo)
        p[f"gc{idx}_w"] = _uniform(keys[2 * idx - 2], (fi, fo), stdv)
        p[f"gc{idx}_b"] = _uniform(keys[2 * idx - 1], (fo,), stdv)
    in1 = gc_out_dim * global_cluster_num
    b1 = 1.0 / math.sqrt(in1)
    p["fc1_w"] = _uniform(keys[6], (in1, hidden_dim), b1)
    p["fc1_b"] = _uniform(keys[7], (hidden_dim,), b1)
    b2 = 1.0 / math.sqrt(hidden_dim)
    p["fc2_w"] = _uniform(keys[8], (hidden_dim, class_num), b2)
    p["fc2_b"] = _uniform(keys[9], (class_num,), b2)
    # BatchNorm1d(hidden_dim) defaults (eval mode: running stats).
    p["bn_gamma"] = jnp.ones((hidden_dim,), jnp.float32)
    p["bn_beta"] = jnp.zeros((hidden_dim,), jnp.float32)
    p["bn_mean"] = jnp.zeros((hidden_dim,), jnp.float32)
    p["bn_var"] = jnp.ones((hidden_dim,), jnp.float32)
    return p


def gcn_forward(params, x, adj, mask_matrix, groups, num_groups, gc_fn):
    """Eval-mode forward of the PyTorch GCN module (bias+ReLU fused for gc1/gc2)."""
    h = gc_fn(x, adj, params["gc1_w"], params["gc1_b"], apply_relu=True)
    # TODO(synk): F.dropout / nn.Dropout are identity in eval mode; training
    # dropout is not implemented here.
    h = gc_fn(h, adj, params["gc2_w"], params["gc2_b"], apply_relu=True)
    h = gc_fn(h, adj, params["gc3_w"], params["gc3_b"], apply_relu=False)
    h = _scatter_max(h, groups, num_groups)               # (B, G, 16)
    h = h * mask_matrix[:, :, None]
    h = h.reshape(h.shape[0], -1)                          # (B, 16*G)
    # classify_layer: Linear -> BatchNorm1d(eval) -> ReLU -> Dropout(eval) -> Linear
    h = h @ params["fc1_w"] + params["fc1_b"]
    h = (params["bn_gamma"] * (h - params["bn_mean"])
         * jax.lax.rsqrt(params["bn_var"] + 1e-5) + params["bn_beta"])
    h = jax.nn.relu(h)
    h = h @ params["fc2_w"] + params["fc2_b"]
    return h


# ----------------------------------------------------------------------------
# Tests
# ----------------------------------------------------------------------------

if __name__ == "__main__":
    key = jax.random.PRNGKey(0)

    # ---- Check 1: small-path GraphConvolution at the module's shapes ----
    B, N = 2, 8
    in_feature, out_feature = 16, 32
    k_w, k_b, k_x, k_a, k_rest = jax.random.split(key, 5)
    stdv = 1.0 / math.sqrt(out_feature)
    weight = _uniform(k_w, (in_feature, out_feature), stdv)
    bias = _uniform(k_b, (out_feature,), stdv)
    x = jax.random.normal(k_x, (B, N, in_feature), jnp.float32)
    adj = jax.random.uniform(k_a, (B, N, N), jnp.float32)

    out = jax.block_until_ready(graph_convolution(x, adj, weight, bias))
    ref = graph_convolution_reference(x, adj, weight, bias)
    assert out.shape == (B, N, out_feature)
    assert jnp.allclose(out, ref, atol=1e-4, rtol=1e-4), "small GC mismatch"

    # ---- Check 2: tiled weight-last path (N=600 -> N_pad=768, TM=256) ----
    k1, k2, k3, k4, k_rest = jax.random.split(k_rest, 5)
    B2, N2, Fi2, Fo2 = 2, 600, 72, 200        # Fin_p <= Fout_p -> weight-last
    w2 = _uniform(k1, (Fi2, Fo2), 1.0 / math.sqrt(Fo2))
    b2 = _uniform(k2, (Fo2,), 1.0 / math.sqrt(Fo2))
    x2 = jax.random.normal(k3, (B2, N2, Fi2), jnp.float32)
    a2 = jax.random.uniform(k4, (B2, N2, N2), jnp.float32)
    out2 = jax.block_until_ready(graph_convolution(x2, a2, w2, b2))
    ref2 = graph_convolution_reference(x2, a2, w2, b2)
    assert out2.shape == (B2, N2, Fo2)
    assert jnp.allclose(out2, ref2, rtol=1e-3, atol=1e-2), "tiled GC mismatch"

    # ---- Check 3: tiled support-first path (Fout_p < Fin_p, hoisted x@W) ----
    k5, k6, k7, k8, k_rest = jax.random.split(k_rest, 5)
    B3, N3, Fi3, Fo3 = 1, 700, 384, 64
    w3 = _uniform(k5, (Fi3, Fo3), 1.0 / math.sqrt(Fo3))
    b3 = _uniform(k6, (Fo3,), 1.0 / math.sqrt(Fo3))
    x3 = jax.random.normal(k7, (B3, N3, Fi3), jnp.float32)
    a3 = jax.random.uniform(k8, (B3, N3, N3), jnp.float32)
    out3 = jax.block_until_ready(
        graph_convolution(x3, a3, w3, b3, apply_relu=True))
    ref3 = graph_convolution_reference(x3, a3, w3, b3, apply_relu=True)
    assert out3.shape == (B3, N3, Fo3)
    assert jnp.allclose(out3, ref3, rtol=1e-3, atol=1e-2), "support-first GC mismatch"

    # ---- Check 4: full GCN module forward (eval mode) on small shapes ----
    fea_dim, class_num, global_cluster_num = 16, 5, 4
    kp, kx, ka, k_rest = jax.random.split(k_rest, 4)
    params = init_gcn_params(kp, fea_dim, class_num, global_cluster_num)
    xg = jax.random.normal(kx, (B, N, fea_dim), jnp.float32)
    ag = jax.random.uniform(ka, (B, N, N), jnp.float32)
    groups = jnp.array([[0, 1, 2, 3, 0, 1, 2, 3],
                        [3, 2, 1, 0, 3, 2, 1, 0]], jnp.int32)
    mask_matrix = jnp.array([[1.0, 1.0, 0.0, 1.0],
                             [1.0, 0.0, 1.0, 1.0]], jnp.float32)

    logits = jax.block_until_ready(
        gcn_forward(params, xg, ag, mask_matrix, groups, global_cluster_num,
                    graph_convolution))
    logits_ref = gcn_forward(params, xg, ag, mask_matrix, groups,
                             global_cluster_num, graph_convolution_reference)
    assert logits.shape == (B, class_num)
    assert jnp.allclose(logits, logits_ref, atol=1e-4, rtol=1e-4), "GCN forward mismatch"

    print("KERNEL_OK")
</pallas_src>

<mosaic_0001>
module attributes {stable_mosaic.version = 11 : i64} {
  func.func @_gc_small_kernel(%arg0: i32, %arg1: memref<1x128x128xf32, #tpu.memory_space<vmem>>, %arg2: memref<1x8x128xf32, #tpu.memory_space<vmem>>, %arg3: memref<128x128xf32, #tpu.memory_space<vmem>>, %arg4: memref<1x128xf32, #tpu.memory_space<vmem>>, %arg5: memref<1x8x128xf32, #tpu.memory_space<vmem>>) attributes {dimension_semantics = [#tpu.dimension_semantics<parallel>], iteration_bounds = array<i64: 2>, scalar_prefetch = 0 : i64, scratch_operands = 0 : i64, tpu.core_type = #tpu.core_type<tc>, window_params = [{transform_indices = @transform_0, window_bounds = array<i64: 1, 128, 128>}, {transform_indices = @transform_1, window_bounds = array<i64: 1, 8, 128>}, {pipeline_mode = #tpu.pipeline_mode<synchronous>, transform_indices = @transform_2, window_bounds = array<i64: 128, 128>}, {pipeline_mode = #tpu.pipeline_mode<synchronous>, transform_indices = @transform_3, window_bounds = array<i64: 1, 128>}, {transform_indices = @transform_4, window_bounds = array<i64: 1, 8, 128>}]} {
    %c0 = arith.constant 0 : index
    %c0_0 = arith.constant 0 : index
    %c0_1 = arith.constant 0 : index
    %0 = vector.load %arg2[%c0, %c0_0, %c0_1] : memref<1x8x128xf32, #tpu.memory_space<vmem>>, vector<1x8x128xf32>
    %1 = vector.shape_cast %0 : vector<1x8x128xf32> to vector<8x128xf32>
    %c0_2 = arith.constant 0 : index
    %c0_3 = arith.constant 0 : index
    %c0_4 = arith.constant 0 : index
    %2 = vector.load %arg1[%c0_2, %c0_3, %c0_4] : memref<1x128x128xf32, #tpu.memory_space<vmem>>, vector<1x128x128xf32>
    %3 = vector.shape_cast %2 : vector<1x128x128xf32> to vector<128x128xf32>
    %c0_5 = arith.constant 0 : index
    %c0_6 = arith.constant 0 : index
    %4 = vector.load %arg3[%c0_5, %c0_6] : memref<128x128xf32, #tpu.memory_space<vmem>>, vector<128x128xf32>
    %cst = arith.constant dense<0.000000e+00> : vector<8x128xf32>
    %5 = tpu.matmul %1, %3, %cst {dimension_numbers = #tpu.dot_dimension_numbers<[1], [0], [0], [1], [0, 0, 1, 1], [], []>} : vector<8x128xf32>, vector<128x128xf32>, vector<8x128xf32> -> vector<8x128xf32>
    %cst_7 = arith.constant dense<0.000000e+00> : vector<8x128xf32>
    %6 = tpu.matmul %5, %4, %cst_7 {dimension_numbers = #tpu.dot_dimension_numbers<[1], [0], [0], [1], [0, 0, 1, 1], [], []>} : vector<8x128xf32>, vector<128x128xf32>, vector<8x128xf32> -> vector<8x128xf32>
    %c0_8 = arith.constant 0 : index
    %c0_9 = arith.constant 0 : index
    %7 = vector.load %arg4[%c0_8, %c0_9] : memref<1x128xf32, #tpu.memory_space<vmem>>, vector<1x128xf32>
    %8 = vector.broadcast %7 : vector<1x128xf32> to vector<8x128xf32>
    %9 = arith.addf %6, %8 : vector<8x128xf32>
    %c0_10 = arith.constant 0 : index
    %c0_11 = arith.constant 0 : index
    %c0_12 = arith.constant 0 : index
    %10 = vector.load %arg5[%c0_10, %c0_11, %c0_12] : memref<1x8x128xf32, #tpu.memory_space<vmem>>, vector<1x8x128xf32>
    %11 = vector.shape_cast %10 : vector<1x8x128xf32> to vector<8x128xf32>
    %12 = vector.shape_cast %9 : vector<8x128xf32> to vector<1x8x128xf32>
    tpu.vector_store %arg5[%c0_10, %c0_11, %c0_12], %12 {strides = array<i32>} : memref<1x8x128xf32, #tpu.memory_space<vmem>>, vector<1x8x128xf32>,
    return
  }
  func.func @transform_0(%arg0: i32) -> (i32, i32, i32) {
    %c0_i32 = arith.constant 0 : i32
    %c0_i32_0 = arith.constant 0 : i32
    %c0_i32_1 = arith.constant 0 : i32
    return %arg0, %c0_i32, %c0_i32_0 : i32, i32, i32
  }
  func.func @transform_1(%arg0: i32) -> (i32, i32, i32) {
    %c0_i32 = arith.constant 0 : i32
    %c0_i32_0 = arith.constant 0 : i32
    %c0_i32_1 = arith.constant 0 : i32
    return %arg0, %c0_i32, %c0_i32_0 : i32, i32, i32
  }
  func.func @transform_2(%arg0: i32) -> (i32, i32) {
    %c0_i32 = arith.constant 0 : i32
    %c0_i32_0 = arith.constant 0 : i32
    %c0_i32_1 = arith.constant 0 : i32
    return %c0_i32, %c0_i32_0 : i32, i32
  }
  func.func @transform_3(%arg0: i32) -> (i32, i32) {
    %c0_i32 = arith.constant 0 : i32
    %c0_i32_0 = arith.constant 0 : i32
    %c0_i32_1 = arith.constant 0 : i32
    return %c0_i32, %c0_i32_0 : i32, i32
  }
  func.func @transform_4(%arg0: i32) -> (i32, i32, i32) {
    %c0_i32 = arith.constant 0 : i32
    %c0_i32_0 = arith.constant 0 : i32
    %c0_i32_1 = arith.constant 0 : i32
    return %arg0, %c0_i32, %c0_i32_0 : i32, i32, i32
  }
}

</mosaic_0001>

<llo_original>
// kernel: tpu_custom_call.1
$region0: #{tpu_custom_call.1}
  #allocation0 [shape = 'u32[]', space=smem, size = 0x4, offset = 0x4, fixed_abs, tag = 'smem constant byte address 0x4 - core index']
  #allocation1 [shape = 'u32[144,128]{1,0:T(1,128)}', space=vmem, size = 0x12000, scoped, tag = 'internal scratch']
  %s0 = inlined_call_operand.hbm [shape: f32[2,128,128], index: 0, kind: input, shape index: {}]
  %s1 = inlined_call_operand.hbm [shape: f32[2,8,128], index: 1, kind: input, shape index: {}]
  %s2 = inlined_call_operand.hbm [shape: f32[128,128], index: 2, kind: input, shape index: {}]
  %s3 = inlined_call_operand.vmem [shape: f32[1,128], index: 3, kind: input, shape index: {}]
  %s4 = inlined_call_operand.hbm [shape: f32[2,8,128], index: 4, kind: output, shape index: {}]
  %s5 = sld [smem:[#allocation0]]
  $region61: #{tpu_custom_call.1} parent=0
    _
  %s7 = ssub.s32 1, %s5
  %s8 = scalar_select 0, %s7, %s5
  $region1: #{tpu_custom_call.1} parent=0
    #allocation2 [shape = 'u8[131072]{0}', space=vmem, size = 0x20000, scoped, tag = 'input window, operand 0']
    #allocation3 [shape = 's32[2]{0}', space=sflag, size = 0x8, scoped, tag = 'scoped memory for tpu_custom_call.1']
    #allocation4 [shape = 's32[2]{0}', space=sflag, size = 0x8, scoped, tag = 'scoped memory for tpu_custom_call.1']
    #allocation5 [shape = 'u8[8192]{0}', space=vmem, size = 0x2000, scoped, tag = 'input window, operand 1']
    #allocation6 [shape = 's32[2]{0}', space=sflag, size = 0x8, scoped, tag = 'scoped memory for tpu_custom_call.1']
    #allocation7 [shape = 'u8[65536]{0}', space=vmem, size = 0x10000, scoped, tag = 'input window, operand 2, single buffered']
    #allocation8 [shape = 'u8[8192]{0}', space=vmem, size = 0x2000, scoped, tag = 'output window, operand 0']
    %9 = vsyncpa [#allocation3], 0
    %s10 = scalar_lea.sflag [#allocation3], 1
    %11 = vsyncpa %s10, 0
    %12 = vsyncpa [#allocation6], 0
    %s13 = scalar_lea.sflag [#allocation6], 1
    %14 = vsyncpa %s13, 0
    %15 = vsyncpa [#allocation4], 0
    %s16 = scalar_lea.sflag [#allocation4], 1
    %17 = vsyncpa %s16, 0
    loop: start=0, step=1, limit=4
    $region2: #{tpu_custom_call.1} parent=1 // loop_pre_header
      _
    $region3: #{tpu_custom_call.1} parent=1 // loop_header
      %s19 = sphi 0, %s23
      %p20 = scmp.ge.s32.totalorder %s19, 4
      %s29 = sphi 0, %s31
      %s32 = sphi 0, %s29
      %s33 = sphi 0, %s32
      %s49 = sphi 0, %s33
      %s55 = sphi 0, %s57
      %s58 = sphi 0, %s55
      %s59 = sphi 0, %s58
      %s75 = sphi 0, %s59
      %s79 = sphi 0, %s79
      %s81 = sphi 0, %s79
      %s82 = sphi 0, %s81
      %s96 = sphi 0, %s82
      %s100 = sphi 0, %s100
      %s102 = sphi 0, %s100
      %s103 = sphi 0, %s102
      %s117 = sphi 0, %s103
      %s123 = sphi 0, %s125
      %s126 = sphi 0, %s123
      %s127 = sphi 0, %s126
      %s143 = sphi 0, %s127
    $region4: #{tpu_custom_call.1} parent=1 // loop_header_branch
      %22 = sbr.rel (%p20) target = $region8
    $region5: #{tpu_custom_call.1} parent=1 // loop_body
      %s24 = ssub.s32 %s19, 1
      %s25 = ssub.s32 %s19, 2
      %s26 = sadd.s32 %s19, 1
      %s27 = ssub.s32 %s19, %s26
      %p28 = scmp.eq.s32.totalorder %s27, 0
      %s30 = sadd.s32 %s29, 1
      %s31 = scalar_select %p28, %s29, %s30
      %p34 = pneg %p28
      %p35 = scmp.eq.s32.totalorder %s19, 1
      %p36 = por %p34, %p35
      %p37 = scmp.ne.s32.totalorder %s29, %s32
      %p38 = scmp.eq.s32.totalorder %s19, 0
      %p39 = por %p37, %p38
      %p40 = scmp.ne.s32.totalorder %s29, %s32
      %p41 = scmp.eq.s32.totalorder %s24, 1
      %p42 = por %p40, %p41
      %p43 = scmp.ne.s32.totalorder %s32, %s33
      %p44 = scmp.eq.s32.totalorder %s24, 0
      %p45 = por %p43, %p44
      %p46 = scmp.ne.s32.totalorder %s32, %s33
      %p47 = scmp.eq.s32.totalorder %s25, 1
      %p48 = por %p46, %p47
      %p50 = scmp.ne.s32.totalorder %s33, %s49
      %p51 = scmp.eq.s32.totalorder %s25, 0
      %p52 = por %p50, %p51
      %s53 = ssub.s32 %s19, %s26
      %p54 = scmp.eq.s32.totalorder %s53, 0
      %s56 = sadd.s32 %s55, 1
      %s57 = scalar_select %p54, %s55, %s56
      %p60 = pneg %p54
      %p61 = scmp.eq.s32.totalorder %s19, 1
      %p62 = por %p60, %p61
      %p63 = scmp.ne.s32.totalorder %s55, %s58
      %p64 = scmp.eq.s32.totalorder %s19, 0
      %p65 = por %p63, %p64
      %p66 = scmp.ne.s32.totalorder %s55, %s58
      %p67 = scmp.eq.s32.totalorder %s24, 1
      %p68 = por %p66, %p67
      %p69 = scmp.ne.s32.totalorder %s58, %s59
      %p70 = scmp.eq.s32.totalorder %s24, 0
      %p71 = por %p69, %p70
      %p72 = scmp.ne.s32.totalorder %s58, %s59
      %p73 = scmp.eq.s32.totalorder %s25, 1
      %p74 = por %p72, %p73
      %p76 = scmp.ne.s32.totalorder %s59, %s75
      %p77 = scmp.eq.s32.totalorder %s25, 0
      %p78 = por %p76, %p77
      %s80 = sadd.s32 %s79, 1
      %p83 = scmp.eq.s32.totalorder %s19, 1
      %p84 = scmp.ne.s32.totalorder %s79, %s81
      %p85 = scmp.eq.s32.totalorder %s19, 0
      %p86 = por %p84, %p85
      %p87 = scmp.ne.s32.totalorder %s79, %s81
      %p88 = scmp.eq.s32.totalorder %s24, 1
      %p89 = por %p87, %p88
      %p90 = scmp.ne.s32.totalorder %s81, %s82
      %p91 = scmp.eq.s32.totalorder %s24, 0
      %p92 = por %p90, %p91
      %p93 = scmp.ne.s32.totalorder %s81, %s82
      %p94 = scmp.eq.s32.totalorder %s25, 1
      %p95 = por %p93, %p94
      %p97 = scmp.ne.s32.totalorder %s82, %s96
      %p98 = scmp.eq.s32.totalorder %s25, 0
      %p99 = por %p97, %p98
      %s101 = sadd.s32 %s100, 1
      %p104 = scmp.eq.s32.totalorder %s19, 1
      %p105 = scmp.ne.s32.totalorder %s100, %s102
      %p106 = scmp.eq.s32.totalorder %s19, 0
      %p107 = por %p105, %p106
      %p108 = scmp.ne.s32.totalorder %s100, %s102
      %p109 = scmp.eq.s32.totalorder %s24, 1
      %p110 = por %p108, %p109
      %p111 = scmp.ne.s32.totalorder %s102, %s103
      %p112 = scmp.eq.s32.totalorder %s24, 0
      %p113 = por %p111, %p112
      %p114 = scmp.ne.s32.totalorder %s102, %s103
      %p115 = scmp.eq.s32.totalorder %s25, 1
      %p116 = por %p114, %p115
      %p118 = scmp.ne.s32.totalorder %s103, %s117
      %p119 = scmp.eq.s32.totalorder %s25, 0
      %p120 = por %p118, %p119
      %s121 = ssub.s32 %s19, %s26
      %p122 = scmp.eq.s32.totalorder %s121, 0
      %s124 = sadd.s32 %s123, 1
      %s125 = scalar_select %p122, %s123, %s124
      %p128 = pneg %p122
      %p129 = scmp.eq.s32.totalorder %s19, 1
      %p130 = por %p128, %p129
      %p131 = scmp.ne.s32.totalorder %s123, %s126
      %p132 = scmp.eq.s32.totalorder %s19, 0
      %p133 = por %p131, %p132
      %p134 = scmp.ne.s32.totalorder %s123, %s126
      %p135 = scmp.eq.s32.totalorder %s24, 1
      %p136 = por %p134, %p135
      %p137 = scmp.ne.s32.totalorder %s126, %s127
      %p138 = scmp.eq.s32.totalorder %s24, 0
      %p139 = por %p137, %p138
      %p140 = scmp.ne.s32.totalorder %s126, %s127
      %p141 = scmp.eq.s32.totalorder %s25, 1
      %p142 = por %p140, %p141
      %p144 = scmp.ne.s32.totalorder %s127, %s143
      %p145 = scmp.eq.s32.totalorder %s25, 0
      %p146 = por %p144, %p145
      %p147 = scmp.le.s32.totalorder 1, %s19
      %p148 = scmp.lt.s32.totalorder %s19, 3
      %p149 = pnand %p147, %p148
      %p150 = pneg %p149
      // Predicated region
      $region9: #{tpu_custom_call.1} parent=5 // pred_check
        _
      $region10: #{tpu_custom_call.1} parent=5 // pred_check_branch
        %152 = sbr.rel (%p149) target = $region12
      $region11: #{tpu_custom_call.1} parent=5 // pred_region
        %s153 = ssub.s32 %s19, 1
        // Predicated region
        $region13: #{tpu_custom_call.1} parent=11 // pred_check
          %p154 = pneg %p92
        $region14: #{tpu_custom_call.1} parent=11 // pred_check_branch
          %156 = sbr.rel (%p154) target = $region16
        $region15: #{tpu_custom_call.1} parent=11 // pred_region
          %s158 = ssub.s32 2048, 2048
          %159 = vsyncadd [#allocation6], %s158
          %s160 = sshll.u32 [#allocation7], 4
          %s161 = int_to_ptr.vmem [resolvable:$true] %s160
          %166 = dma.hbm_to_vmem [thread:$0]  %s2, 2048, %s161, [#allocation6], 128, 128, 8
        $region16: #{tpu_custom_call.1} parent=11 // pred_fallthru
          _
        // Predicated region
        $region17: #{tpu_custom_call.1} parent=11 // pred_check
          %p167 = pneg %p113
        $region18: #{tpu_custom_call.1} parent=11 // pred_check_branch
          %169 = sbr.rel (%p167) target = $region20
        $region19: #{tpu_custom_call.1} parent=11 // pred_region
          _
        $region20: #{tpu_custom_call.1} parent=11 // pred_fallthru
          _
      $region12: #{tpu_custom_call.1} parent=5 // pred_fallthru
        _
      %p170 = scmp.lt.s32.totalorder %s19, 2
      // Predicated region
      $region21: #{tpu_custom_call.1} parent=5 // pred_check
        %p171 = pneg %p170
      $region22: #{tpu_custom_call.1} parent=5 // pred_check_branch
        %173 = sbr.rel (%p171) target = $region24
      $region23: #{tpu_custom_call.1} parent=5 // pred_region
        // Predicated region
        $region25: #{tpu_custom_call.1} parent=23 // pred_check
          %p174 = pneg %p39
        $region26: #{tpu_custom_call.1} parent=23 // pred_check_branch
          %176 = sbr.rel (%p174) target = $region28
        $region27: #{tpu_custom_call.1} parent=23 // pred_region
          %s177 = sand.u32 %s29, 1
          %s178 = scalar_lea.sflag [#allocation3], %s177
          %s179 = sand.u32 %s29, 1
          %s180 = smul.addr %s179, 128
          %s181 = scalar_lea.vmem [#allocation2], %s180
          %s183 = ssub.s32 2048, 2048
          %184 = vsyncadd %s178, %s183
          %s185 = smul.addr %s19, 16
          %s186 = smul.addr %s185, 128
          %s187 = scalar_lea.hbm %s0, %s186
          %s188 = sshll.u32 %s181, 4
          %s189 = int_to_ptr.vmem [resolvable:$true] %s188
          %194 = dma.hbm_to_vmem [thread:$0]  %s187, 2048, %s189, %s178, 128, 128, 8
        $region28: #{tpu_custom_call.1} parent=23 // pred_fallthru
          _
        // Predicated region
        $region29: #{tpu_custom_call.1} parent=23 // pred_check
          %p195 = pneg %p65
        $region30: #{tpu_custom_call.1} parent=23 // pred_check_branch
          %197 = sbr.rel (%p195) target = $region32
        $region31: #{tpu_custom_call.1} parent=23 // pred_region
          %s198 = sand.u32 %s19, 1
          %s199 = scalar_lea.sflag [#allocation6], %s198
          %s200 = sand.u32 %s55, 1
          %s201 = smul.addr %s200, 8
          %s202 = scalar_lea.vmem [#allocation5], %s201
          %s204 = ssub.s32 128, 128
          %205 = vsyncadd %s199, %s204
          %s206 = smul.addr %s19, 128
          %s207 = scalar_lea.hbm %s1, %s206
          %s209 = sshll.u32 %s202, 4
          %s210 = int_to_ptr.vmem [resolvable:$true] %s209
          %212 = dma.hbm_to_vmem [thread:$0]  %s207, 128, %s210, %s199
        $region32: #{tpu_custom_call.1} parent=23 // pred_fallthru
          _
      $region24: #{tpu_custom_call.1} parent=5 // pred_fallthru
        _
      %p213 = scmp.le.s32.totalorder 1, %s19
      %p214 = scmp.lt.s32.totalorder %s19, 3
      %p215 = pnand %p213, %p214
      %p216 = pneg %p215
      // Predicated region
      $region33: #{tpu_custom_call.1} parent=5 // pred_check
        _
      $region34: #{tpu_custom_call.1} parent=5 // pred_check_branch
        %218 = sbr.rel (%p215) target = $region36
      $region35: #{tpu_custom_call.1} parent=5 // pred_region
        %s219 = ssub.s32 %s19, 1
        %s220 = sand.u32 %s32, 1
        %s221 = scalar_lea.sflag [#allocation3], %s220
        %s222 = sand.u32 %s32, 1
        %s223 = smul.addr %s222, 128
        %s224 = scalar_lea.vmem [#allocation2], %s223
        // Predicated region
        $region37: #{tpu_custom_call.1} parent=35 // pred_check
          %p225 = pneg %p45
        $region38: #{tpu_custom_call.1} parent=35 // pred_check_branch
          %227 = sbr.rel (%p225) target = $region40
        $region39: #{tpu_custom_call.1} parent=35 // pred_region
          %228 = dma.done %s221, 2048
        $region40: #{tpu_custom_call.1} parent=35 // pred_fallthru
          _
        %s229 = sand.u32 %s24, 1
        %s230 = scalar_lea.sflag [#allocation6], %s229
        %s231 = sand.u32 %s58, 1
        %s232 = smul.addr %s231, 8
        %s233 = scalar_lea.vmem [#allocation5], %s232
        // Predicated region
        $region41: #{tpu_custom_call.1} parent=35 // pred_check
          %p234 = pneg %p71
        $region42: #{tpu_custom_call.1} parent=35 // pred_check_branch
          %236 = sbr.rel (%p234) target = $region44
        $region43: #{tpu_custom_call.1} parent=35 // pred_region
          %237 = dma.done %s230, 128
        $region44: #{tpu_custom_call.1} parent=35 // pred_fallthru
          _
        // Predicated region
        $region45: #{tpu_custom_call.1} parent=35 // pred_check
          %p238 = pneg %p92
        $region46: #{tpu_custom_call.1} parent=35 // pred_check_branch
          %240 = sbr.rel (%p238) target = $region48
        $region47: #{tpu_custom_call.1} parent=35 // pred_region
          %241 = dma.done [#allocation6], 2048
        $region48: #{tpu_custom_call.1} parent=35 // pred_fallthru
          _
        %s242 = sand.u32 %s32, 1
        %s243 = scalar_lea.sflag [#allocation3], %s242
        %s244 = sand.u32 %s32, 1
        %s245 = smul.addr %s244, 128
        %s246 = scalar_lea.vmem [#allocation2], %s245
        %p247 = pneg %p45
        %p248 = pneg %p42
        %s249 = sand.u32 %s24, 1
        %s250 = scalar_lea.sflag [#allocation6], %s249
        %s251 = sand.u32 %s58, 1
        %s252 = smul.addr %s251, 8
        %s253 = scalar_lea.vmem [#allocation5], %s252
        %p254 = pneg %p71
        %p255 = pneg %p68
        %p256 = pneg %p92
        %p257 = pneg %p89
        %p258 = pneg %p113
        %p259 = pneg %p110
        %p260 = pneg %p139
        %p261 = pneg %p136
        %s262 = sand.u32 %s126, 1
        %s263 = scalar_lea.sflag [#allocation4], %s262
        %s264 = sand.u32 %s126, 1
        %s265 = smul.addr %s264, 8
        %s266 = scalar_lea.vmem [#allocation8], %s265
        %v267 = vld [vmem:[%s233] sm:$0xff]
        %v268 = vld [vmem:[%s224] sm:$0xff]
        %v269 = vld [vmem:[%s224 + $0x8] sm:$0xff]
        %v270 = vld [vmem:[%s224 + $0x10] sm:$0xff]
        %v271 = vld [vmem:[%s224 + $0x18] sm:$0xff]
        %v272 = vld [vmem:[%s224 + $0x20] sm:$0xff]
        %v273 = vld [vmem:[%s224 + $0x28] sm:$0xff]
        %v274 = vld [vmem:[%s224 + $0x30] sm:$0xff]
        %v275 = vld [vmem:[%s224 + $0x38] sm:$0xff]
        %v276 = vld [vmem:[%s224 + $0x40] sm:$0xff]
        %v277 = vld [vmem:[%s224 + $0x48] sm:$0xff]
        %v278 = vld [vmem:[%s224 + $0x50] sm:$0xff]
        %v279 = vld [vmem:[%s224 + $0x58] sm:$0xff]
        %v280 = vld [vmem:[%s224 + $0x60] sm:$0xff]
        %v281 = vld [vmem:[%s224 + $0x68] sm:$0xff]
        %v282 = vld [vmem:[%s224 + $0x70] sm:$0xff]
        %v283 = vld [vmem:[%s224 + $0x78] sm:$0xff]
        %v284 = vld [vmem:[#allocation7] sm:$0xff]
        %v285 = vld [vmem:[#allocation7 + $0x8] sm:$0xff]
        %v286 = vld [vmem:[#allocation7 + $0x10] sm:$0xff]
        %v287 = vld [vmem:[#allocation7 + $0x18] sm:$0xff]
        %v288 = vld [vmem:[#allocation7 + $0x20] sm:$0xff]
        %v289 = vld [vmem:[#allocation7 + $0x28] sm:$0xff]
        %v290 = vld [vmem:[#allocation7 + $0x30] sm:$0xff]
        %v291 = vld [vmem:[#allocation7 + $0x38] sm:$0xff]
        %v292 = vld [vmem:[#allocation7 + $0x40] sm:$0xff]
        %v293 = vld [vmem:[#allocation7 + $0x48] sm:$0xff]
        %v294 = vld [vmem:[#allocation7 + $0x50] sm:$0xff]
        %v295 = vld [vmem:[#allocation7 + $0x58] sm:$0xff]
        %v296 = vld [vmem:[#allocation7 + $0x60] sm:$0xff]
        %v297 = vld [vmem:[#allocation7 + $0x68] sm:$0xff]
        %v298 = vld [vmem:[#allocation7 + $0x70] sm:$0xff]
        %v299 = vld [vmem:[#allocation7 + $0x78] sm:$0xff]
        %300 = vmatprep.subr.mxu0 0.0
        %301 = vmatpush1.msra.mxu0 %v283
        %302 = vmatprep.subr.mxu0 0.0
        %303 = vmatpush1.msra.mxu0 %v282
        %304 = vmatprep.subr.mxu0 0.0
        %305 = vmatpush1.msra.mxu0 %v281
        %306 = vmatprep.subr.mxu0 0.0
        %307 = vmatpush1.msra.mxu0 %v280
        %308 = vmatprep.subr.mxu0 0.0
        %309 = vmatpush1.msra.mxu0 %v279
        %310 = vmatprep.subr.mxu0 0.0
        %311 = vmatpush1.msra.mxu0 %v278
        %312 = vmatprep.subr.mxu0 0.0
        %313 = vmatpush1.msra.mxu0 %v277
        %314 = vmatprep.subr.mxu0 0.0
        %315 = vmatpush1.msra.mxu0 %v276
        %316 = vmatprep.subr.mxu0 0.0
        %317 = vmatpush1.msra.mxu0 %v275
        %318 = vmatprep.subr.mxu0 0.0
        %319 = vmatpush1.msra.mxu0 %v274
        %320 = vmatprep.subr.mxu0 0.0
        %321 = vmatpush1.msra.mxu0 %v273
        %322 = vmatprep.subr.mxu0 0.0
        %323 = vmatpush1.msra.mxu0 %v272
        %324 = vmatprep.subr.mxu0 0.0
        %325 = vmatpush1.msra.mxu0 %v271
        %326 = vmatprep.subr.mxu0 0.0
        %327 = vmatpush1.msra.mxu0 %v270
        %328 = vmatprep.subr.mxu0 0.0
        %329 = vmatpush1.msra.mxu0 %v269
        %330 = vmatprep.subr.mxu0 0.0
        %331 = vmatpush1.msra.mxu0 %v268
        %332 = vmatprep.subr.mxu0 0.0
        %333 = vmatpush2.msra.mxu0 0.0
        %334 = vmatprep.subr.mxu0 0.0
        %335 = vmatpush2.msra.mxu0 0.0
        %336 = vmatprep.subr.mxu0 0.0
        %337 = vmatpush2.msra.mxu0 0.0
        %338 = vmatprep.subr.mxu0 0.0
        %339 = vmatpush2.msra.mxu0 0.0
        %340 = vmatprep.subr.mxu0 0.0
        %341 = vmatpush2.msra.mxu0 0.0
        %342 = vmatprep.subr.mxu0 0.0
        %343 = vmatpush2.msra.mxu0 0.0
        %344 = vmatprep.subr.mxu0 0.0
        %345 = vmatpush2.msra.mxu0 0.0
        %346 = vmatprep.subr.mxu0 0.0
        %347 = vmatpush2.msra.mxu0 0.0
        %348 = vmatprep.subr.mxu0 0.0
        %349 = vmatpush2.msra.mxu0 0.0
        %350 = vmatprep.subr.mxu0 0.0
        %351 = vmatpush2.msra.mxu0 0.0
        %352 = vmatprep.subr.mxu0 0.0
        %353 = vmatpush2.msra.mxu0 0.0
        %354 = vmatprep.subr.mxu0 0.0
        %355 = vmatpush2.msra.mxu0 0.0
        %356 = vmatprep.subr.mxu0 0.0
        %357 = vmatpush2.msra.mxu0 0.0
        %358 = vmatprep.subr.mxu0 0.0
        %359 = vmatpush2.msra.mxu0 0.0
        %360 = vmatprep.subr.mxu0 0.0
        %361 = vmatpush2.msra.mxu0 0.0
        %362 = vmatprep.subr.mxu0 0.0
        %363 = vmatpush2.msra.mxu0 0.0
        %364 = vmatprep.mubr.f32.mxu0 0.0
        %365 = vmatmul.mubr.f32.gmra.mxu0 %v267
        %v366 = vpop.f32.mrf.mxu0
        %v367 = vadd.f32 0.0, %v366
        %v368 = vpop.f32.mrf.mxu0
        %369 = vdwg.mxu0
        %v370 = vld [vmem:[%s3] sm:$0x1]
        %v372 = vlaneseq
        %v373 = vshrl.u32 %v372, 7
        %v374 = vsub.s32 0, %v373
        %v375 = vrot.slane %v370, %v374
        %377 = vmatprep.subr.mxu0 0.0
        %378 = vmatpush1.msra.mxu0 %v299
        %379 = vmatprep.subr.mxu0 0.0
        %380 = vmatpush1.msra.mxu0 %v298
        %381 = vmatprep.subr.mxu0 0.0
        %382 = vmatpush1.msra.mxu0 %v297
        %383 = vmatprep.subr.mxu0 0.0
        %384 = vmatpush1.msra.mxu0 %v296
        %385 = vmatprep.subr.mxu0 0.0
        %386 = vmatpush1.msra.mxu0 %v295
        %387 = vmatprep.subr.mxu0 0.0
        %388 = vmatpush1.msra.mxu0 %v294
        %389 = vmatprep.subr.mxu0 0.0
        %390 = vmatpush1.msra.mxu0 %v293
        %391 = vmatprep.subr.mxu0 0.0
        %392 = vmatpush1.msra.mxu0 %v292
        %393 = vmatprep.subr.mxu0 0.0
        %394 = vmatpush1.msra.mxu0 %v291
        %395 = vmatprep.subr.mxu0 0.0
        %396 = vmatpush1.msra.mxu0 %v290
        %397 = vmatprep.subr.mxu0 0.0
        %398 = vmatpush1.msra.mxu0 %v289
        %399 = vmatprep.subr.mxu0 0.0
        %400 = vmatpush1.msra.mxu0 %v288
        %401 = vmatprep.subr.mxu0 0.0
        %402 = vmatpush1.msra.mxu0 %v287
        %403 = vmatprep.subr.mxu0 0.0
        %404 = vmatpush1.msra.mxu0 %v286
        %405 = vmatprep.subr.mxu0 0.0
        %406 = vmatpush1.msra.mxu0 %v285
        %407 = vmatprep.subr.mxu0 0.0
        %408 = vmatpush1.msra.mxu0 %v284
        %409 = vmatprep.subr.mxu0 0.0
        %410 = vmatpush2.msra.mxu0 0.0
        %411 = vmatprep.subr.mxu0 0.0
        %412 = vmatpush2.msra.mxu0 0.0
        %413 = vmatprep.subr.mxu0 0.0
        %414 = vmatpush2.msra.mxu0 0.0
        %415 = vmatprep.subr.mxu0 0.0
        %416 = vmatpush2.msra.mxu0 0.0
        %417 = vmatprep.subr.mxu0 0.0
        %418 = vmatpush2.msra.mxu0 0.0
        %419 = vmatprep.subr.mxu0 0.0
        %420 = vmatpush2.msra.mxu0 0.0
        %421 = vmatprep.subr.mxu0 0.0
        %422 = vmatpush2.msra.mxu0 0.0
        %423 = vmatprep.subr.mxu0 0.0
        %424 = vmatpush2.msra.mxu0 0.0
        %425 = vmatprep.subr.mxu0 0.0
        %426 = vmatpush2.msra.mxu0 0.0
        %427 = vmatprep.subr.mxu0 0.0
        %428 = vmatpush2.msra.mxu0 0.0
        %429 = vmatprep.subr.mxu0 0.0
        %430 = vmatpush2.msra.mxu0 0.0
        %431 = vmatprep.subr.mxu0 0.0
        %432 = vmatpush2.msra.mxu0 0.0
        %433 = vmatprep.subr.mxu0 0.0
        %434 = vmatpush2.msra.mxu0 0.0
        %435 = vmatprep.subr.mxu0 0.0
        %436 = vmatpush2.msra.mxu0 0.0
        %437 = vmatprep.subr.mxu0 0.0
        %438 = vmatpush2.msra.mxu0 0.0
        %439 = vmatprep.subr.mxu0 0.0
        %440 = vmatpush2.msra.mxu0 0.0
        %441 = vmatprep.mubr.f32.mxu0 0.0
        %442 = vmatmul.mubr.f32.gmra.mxu0 %v367
        %v443 = vpop.f32.mrf.mxu0
        %v444 = vadd.f32 %v375, %v443
        %v445 = vpop.f32.mrf.mxu0
        %446 = vdwg.mxu0
        %447 = vst [vmem:[%s266] sm:$0xff] %v444
        %s448 = sand.u32 %s126, 1
        %s449 = scalar_lea.sflag [#allocation4], %s448
        %s450 = sand.u32 %s126, 1
        %s451 = smul.addr %s450, 8
        %s452 = scalar_lea.vmem [#allocation8], %s451
        // Predicated region
        $region49: #{tpu_custom_call.1} parent=35 // pred_check
          %p453 = pneg %p136
        $region50: #{tpu_custom_call.1} parent=35 // pred_check_branch
          %455 = sbr.rel (%p453) target = $region52
        $region51: #{tpu_custom_call.1} parent=35 // pred_region
          %s457 = ssub.s32 128, 128
          %458 = vsyncadd %s449, %s457
          %s459 = smul.addr %s24, 128
          %s460 = scalar_lea.hbm %s4, %s459
          %s462 = sshll.u32 %s452, 4
          %s463 = int_to_ptr.vmem [resolvable:$true] %s462
          %465 = dma.vmem_to_hbm [thread:$0]  %s463, 128, %s460, %s449
        $region52: #{tpu_custom_call.1} parent=35 // pred_fallthru
          _
      $region36: #{tpu_custom_call.1} parent=5 // pred_fallthru
        _
      %p466 = scmp.le.s32.totalorder 2, %s19
      // Predicated region
      $region53: #{tpu_custom_call.1} parent=5 // pred_check
        %p467 = pneg %p466
      $region54: #{tpu_custom_call.1} parent=5 // pred_check_branch
        %469 = sbr.rel (%p467) target = $region56
      $region55: #{tpu_custom_call.1} parent=5 // pred_region
        %s470 = ssub.s32 %s19, 2
        // Predicated region
        $region57: #{tpu_custom_call.1} parent=55 // pred_check
          %p471 = pneg %p142
        $region58: #{tpu_custom_call.1} parent=55 // pred_check_branch
          %473 = sbr.rel (%p471) target = $region60
        $region59: #{tpu_custom_call.1} parent=55 // pred_region
          %s474 = sand.u32 %s127, 1
          %s475 = scalar_lea.sflag [#allocation4], %s474
          %s476 = sand.u32 %s127, 1
          %s477 = smul.addr %s476, 8
          %s478 = scalar_lea.vmem [#allocation8], %s477
          %479 = dma.done %s475, 128
        $region60: #{tpu_custom_call.1} parent=55 // pred_fallthru
          _
      $region56: #{tpu_custom_call.1} parent=5 // pred_fallthru
        _
    $region6: #{tpu_custom_call.1} parent=1 // loop_footer
      %s23 = sadd.s32 1, %s19
    $region7: #{tpu_custom_call.1} parent=1 // loop_footer_branch
      %18 = sbr.rel target = $region3
    $region8: #{tpu_custom_call.1} parent=1 // loop_exit
      _
    %480 = vsyncpa [#allocation3], 1
    %s481 = scalar_lea.sflag [#allocation3], 1
    %482 = vsyncpa %s481, 1
    %483 = vsyncpa [#allocation6], 1
    %s484 = scalar_lea.sflag [#allocation6], 1
    %485 = vsyncpa %s484, 1
    %486 = vsyncpa [#allocation4], 1
    %s487 = scalar_lea.sflag [#allocation4], 1
    %488 = vsyncpa %s487, 1

</llo_original>
